<compile_context>
chip_gen: v7x
topology: tpu7x:2x2x1
jax: 0.10.0
libtpu: 0.0.40
codegen_flags: <defaults>
</compile_context>

<pallas_src>
import jax
import jax.numpy as jnp
from jax.experimental import pallas as pl
from jax.experimental.pallas import tpu as pltpu


# ---------------------------------------------------------------------------
# Kernels (elementwise hot path)
# ---------------------------------------------------------------------------

def _heaviside_kernel(x_ref, o_ref):
    x = x_ref[...]
    o_ref[...] = (x >= 0).astype(o_ref.dtype)


def _make_primitive_kernel(alpha):
    """Primitive function kernel with alpha baked in as a Python constant."""
    alpha = float(alpha)

    def kernel(x_ref, o_ref):
        # Compute in f32: v5e has no bf16 VPU/EUP path, and log1p keeps
        # precision for small |x|.  Downcast on store.
        xf = x_ref[...].astype(jnp.float32)
        sign = jnp.where(xf >= 0.0, 1.0, -1.0)        # NonzeroSign: +1 / -1
        o_ref[...] = (sign * jnp.log1p(alpha * jnp.abs(xf))).astype(o_ref.dtype)

    return kernel


# ---------------------------------------------------------------------------
# Layout helpers
# ---------------------------------------------------------------------------

_LANE = 128
_TARGET_BLOCK_BYTES = 2 * 1024 * 1024   # ~2 MiB per block: good pipelining,
                                        # 4 buffers (in+out, double-buffered)
                                        # stay well under scoped VMEM on v7x.


def _flatten_lane_dense(x):
    """Flatten x into a lane-dense [rows, width] slab with minimal/no padding."""
    n = x.size
    flat = jnp.ravel(x)
    # Prefer the widest lane dim that divides n exactly -> long contiguous DMA
    # bursts, unmasked full-width stores, and zero padding copies.
    for w in (1024, 512, 256, _LANE):
        if n % w == 0:
            return flat.reshape(n // w, w), n
    # Ragged total: pad only to the next multiple of 128 (minimal extra traffic).
    n_pad = pl.cdiv(n, _LANE) * _LANE
    flat = jnp.concatenate([flat, jnp.zeros((n_pad - n,), x.dtype)])
    return flat.reshape(n_pad // _LANE, _LANE), n


def _row_tile(rows, width, itemsize):
    """Pick a row-tile giving ~2 MiB blocks, aligned to the packed-sublane size."""
    align = max(8, 32 // max(1, itemsize))    # 8 for f32, 16 for bf16, 32 for int8
    tr = max(align, _TARGET_BLOCK_BYTES // (width * itemsize))
    tr = (tr // align) * align
    if tr >= rows:
        return rows                            # full-dim block is always legal
    return tr


def _elementwise_call(kernel, x2d):
    rows, width = x2d.shape
    tr = _row_tile(rows, width, x2d.dtype.itemsize)
    spec = pl.BlockSpec((tr, width), lambda i: (i, 0))
    return pl.pallas_call(
        kernel,
        out_shape=jax.ShapeDtypeStruct((rows, width), x2d.dtype),
        grid=(pl.cdiv(rows, tr),),
        in_specs=[spec],
        out_specs=spec,
        compiler_params=pltpu.CompilerParams(
            # Independent row tiles: shard across both TensorCores on v7x;
            # no-op on single-TC v5e/v6e.
            dimension_semantics=("parallel",),
        ),
    )(x2d)


# ---------------------------------------------------------------------------
# Module wrapper
# ---------------------------------------------------------------------------

class NonzeroSignLogAbs:
    """JAX/Pallas forward-pass equivalent of spikingjelly's NonzeroSignLogAbs."""

    def __init__(self, alpha=1.0, spiking=True):
        self.spiking = spiking
        if spiking:
            # inv_alpha is only used by the surrogate backward in PyTorch.
            self.coefficient = 1.0 / alpha
            self._kernel = _heaviside_kernel
        else:
            self.coefficient = alpha
            self._kernel = _make_primitive_kernel(alpha)

    def __call__(self, x):
        x2d, n = _flatten_lane_dense(x)
        y2d = _elementwise_call(self._kernel, x2d)
        return jnp.ravel(y2d)[:n].reshape(x.shape)


# ---------------------------------------------------------------------------
# Reference (plain JAX) for sanity check
# ---------------------------------------------------------------------------

def _ref_forward(x, alpha, spiking):
    if spiking:
        return (x >= 0).astype(x.dtype)
    sign = jnp.where(x >= 0, 1.0, -1.0).astype(jnp.float32)
    return (sign * jnp.log1p(alpha * jnp.abs(x).astype(jnp.float32))).astype(x.dtype)


if __name__ == "__main__":
    key = jax.random.PRNGKey(0)
    x = jax.random.normal(key, (2, 4, 16, 16), dtype=jnp.float32)  # NCHW

    # spiking=True path (heaviside forward)
    mod_spk = NonzeroSignLogAbs(alpha=1.0, spiking=True)
    y_spk = jax.block_until_ready(mod_spk(x))
    ref_spk = _ref_forward(x, 1.0, True)
    assert y_spk.shape == x.shape and y_spk.dtype == x.dtype
    assert jnp.allclose(y_spk, ref_spk), "spiking forward mismatch"

    # spiking=False path (primitive function forward), non-trivial alpha
    alpha = 2.0
    mod_prim = NonzeroSignLogAbs(alpha=alpha, spiking=False)
    y_prim = jax.block_until_ready(mod_prim(x))
    ref_prim = _ref_forward(x, alpha, False)
    assert y_prim.shape == x.shape and y_prim.dtype == x.dtype
    assert jnp.allclose(y_prim, ref_prim, atol=1e-6), "primitive forward mismatch"

    print("KERNEL_OK")
</pallas_src>

<mosaic_0001>
module attributes {stable_mosaic.version = 11 : i64} {
  func.func @_heaviside_kernel(%arg0: i32, %arg1: memref<2x1024xf32, #tpu.memory_space<vmem>>, %arg2: memref<2x1024xf32, #tpu.memory_space<vmem>>) attributes {dimension_semantics = [#tpu.dimension_semantics<parallel>], iteration_bounds = array<i64: 1>, scalar_prefetch = 0 : i64, scratch_operands = 0 : i64, tpu.core_type = #tpu.core_type<tc>, window_params = [{transform_indices = @transform_0, window_bounds = array<i64: 2, 1024>}, {transform_indices = @transform_1, window_bounds = array<i64: 2, 1024>}]} {
    %c0 = arith.constant 0 : index
    %c0_0 = arith.constant 0 : index
    %0 = vector.load %arg1[%c0, %c0_0] : memref<2x1024xf32, #tpu.memory_space<vmem>>, vector<2x1024xf32>
    %cst = arith.constant 0.000000e+00 : f32
    %1 = vector.broadcast %cst : f32 to vector<2x1024xf32>
    %2 = arith.cmpf oge, %0, %1 : vector<2x1024xf32>
    %3 = arith.extui %2 : vector<2x1024xi1> to vector<2x1024xi32>
    %4 = arith.sitofp %3 : vector<2x1024xi32> to vector<2x1024xf32>
    %c0_1 = arith.constant 0 : index
    %c0_2 = arith.constant 0 : index
    %5 = vector.load %arg2[%c0_1, %c0_2] : memref<2x1024xf32, #tpu.memory_space<vmem>>, vector<2x1024xf32>
    tpu.vector_store %arg2[%c0_1, %c0_2], %4 {strides = array<i32>} : memref<2x1024xf32, #tpu.memory_space<vmem>>, vector<2x1024xf32>,
    return
  }
  func.func @transform_0(%arg0: i32) -> (i32, i32) {
    %c0_i32 = arith.constant 0 : i32
    %c0_i32_0 = arith.constant 0 : i32
    return %arg0, %c0_i32 : i32, i32
  }
  func.func @transform_1(%arg0: i32) -> (i32, i32) {
    %c0_i32 = arith.constant 0 : i32
    %c0_i32_0 = arith.constant 0 : i32
    return %arg0, %c0_i32 : i32, i32
  }
}

</mosaic_0001>

<llo_original>
// kernel: tpu_custom_call.1
$region0: #{tpu_custom_call.1}
  #allocation0 [shape = 'u32[]', space=smem, size = 0x4, offset = 0x4, fixed_abs, tag = 'smem constant byte address 0x4 - core index']
  #allocation1 [shape = 'u32[144,128]{1,0:T(1,128)}', space=vmem, size = 0x12000, scoped, tag = 'internal scratch']
  %s0 = inlined_call_operand.hbm [shape: f32[2,1024], index: 0, kind: input, shape index: {}]
  %s1 = inlined_call_operand.hbm [shape: f32[2,1024], index: 1, kind: output, shape index: {}]
  %s2 = sld [smem:[#allocation0]]
  $region18: #{tpu_custom_call.1} parent=0
    _
  %s4 = ssub.s32 1, %s2
  %s5 = scalar_select 0, %s4, %s2
  $region1: #{tpu_custom_call.1} parent=0
    #allocation2 [shape = 'u8[8192]{0}', space=vmem, size = 0x2000, scoped, tag = 'input window, operand 0, single buffered']
    #allocation3 [shape = 's32[1]{0}', space=sflag, size = 0x4, scoped, tag = 'scoped memory for tpu_custom_call.1']
    #allocation4 [shape = 's32[1]{0}', space=sflag, size = 0x4, scoped, tag = 'scoped memory for tpu_custom_call.1']
    #allocation5 [shape = 'u8[8192]{0}', space=vmem, size = 0x2000, scoped, tag = 'output window, operand 0, single buffered']
    %6 = vsyncpa [#allocation3], 0
    %7 = vsyncpa [#allocation4], 0
    // Predicated region
    $region2: #{tpu_custom_call.1} parent=1 // pred_check
      _
    $region3: #{tpu_custom_call.1} parent=1 // pred_check_branch
      %9 = sbr.rel (0) target = $region5
    $region4: #{tpu_custom_call.1} parent=1 // pred_region
      %s11 = ssub.s32 256, 256
      %12 = vsyncadd [#allocation3], %s11
      %s14 = sshll.u32 [#allocation2], 4
      %s15 = int_to_ptr.vmem [resolvable:$true] %s14
      %17 = dma.hbm_to_vmem [thread:$0]  %s0, 256, %s15, [#allocation3]
    $region5: #{tpu_custom_call.1} parent=1 // pred_fallthru
      _
    // Predicated region
    $region6: #{tpu_custom_call.1} parent=1 // pred_check
      _
    $region7: #{tpu_custom_call.1} parent=1 // pred_check_branch
      %19 = sbr.rel (0) target = $region9
    $region8: #{tpu_custom_call.1} parent=1 // pred_region
      %20 = dma.done [#allocation3], 256
    $region9: #{tpu_custom_call.1} parent=1 // pred_fallthru
      _
    %v21 = vld [vmem:[#allocation2] sm:$0xff]
    %v22 = vld [vmem:[#allocation2 + $0x8] sm:$0xff]
    %vm23 = vcmp.ge.f32.partialorder %v21, 0.0
    %vm24 = vcmp.ge.f32.partialorder %v22, 0.0
    %v25 = vsel %vm23, 1, 0
    %v26 = vsel %vm24, 1, 0
    %v27 = vcvt.s32.f32 %v25
    %v28 = vcvt.s32.f32 %v26
    %29 = vst [vmem:[#allocation5] sm:$0xff] %v27
    %30 = vst [vmem:[#allocation5 + $0x8] sm:$0xff] %v28
    // Predicated region
    $region10: #{tpu_custom_call.1} parent=1 // pred_check
      _
    $region11: #{tpu_custom_call.1} parent=1 // pred_check_branch
      %32 = sbr.rel (0) target = $region13
    $region12: #{tpu_custom_call.1} parent=1 // pred_region
      %s34 = ssub.s32 256, 256
      %35 = vsyncadd [#allocation4], %s34
      %s37 = sshll.u32 [#allocation5], 4
      %s38 = int_to_ptr.vmem [resolvable:$true] %s37
      %40 = dma.vmem_to_hbm [thread:$0]  %s38, 256, %s1, [#allocation4]
    $region13: #{tpu_custom_call.1} parent=1 // pred_fallthru
      _
    // Predicated region
    $region14: #{tpu_custom_call.1} parent=1 // pred_check
      _
    $region15: #{tpu_custom_call.1} parent=1 // pred_check_branch
      %42 = sbr.rel (0) target = $region17
    $region16: #{tpu_custom_call.1} parent=1 // pred_region
      %43 = dma.done [#allocation4], 256
    $region17: #{tpu_custom_call.1} parent=1 // pred_fallthru
      _
    %44 = vsyncpa [#allocation3], 1
    %45 = vsyncpa [#allocation4], 1

</llo_original>
